<compile_context>
chip_gen: v5e
topology: v5e:2x2
jax: 0.10.0
libtpu: 0.0.40
codegen_flags: <defaults>
</compile_context>

<pallas_src>
import jax
import jax.numpy as jnp
from jax.experimental import pallas as pl
from jax.experimental.pallas import tpu as pltpu

IN_DIM = 28 * 28     # 784  (full-extent last dim for the x block -> OK)
HID = 200            # logical hidden size (nn.Linear(784, 200))
OUT_DIM = 10         # logical output size
HID_P = 256          # lane-dense padded hidden (multiple of 128)
OUT_P = 128          # lane-dense padded output
MAX_TB = 512         # batch tile per grid step (bf16 x tile ~0.8 MiB)


def _round_up(n, m):
    return ((n + m - 1) // m) * m


def _cdiv(a, b):
    return (a + b - 1) // b


def mlp_kernel(x_ref, w1_ref, b1_ref, w2_ref, b2_ref, w3_ref, b3_ref, o_ref):
    # x arrives already bf16 (cast in the wrapper); every matmul hits the
    # bf16 MXU path and accumulates in f32. Bias add + ReLU stay f32.
    x = x_ref[...]

    z = jnp.dot(x, w1_ref[...], preferred_element_type=jnp.float32) + b1_ref[...]
    z = jnp.maximum(z, 0.0)

    f = jnp.dot(z.astype(jnp.bfloat16), w2_ref[...],
                preferred_element_type=jnp.float32) + b2_ref[...]
    f = jnp.maximum(f, 0.0)

    y = jnp.dot(f.astype(jnp.bfloat16), w3_ref[...],
                preferred_element_type=jnp.float32) + b3_ref[...]
    y = jnp.maximum(y, 0.0)

    # bf16 writeback halves output HBM traffic; OUT_P=128 keeps it unmasked.
    o_ref[...] = y.astype(o_ref.dtype)


def neural_network_forward(x, prepared_params):
    """x: (B, 784) f32.  prepared_params: padded bf16 weights / f32 biases."""
    w1, b1, w2, b2, w3, b3 = prepared_params
    B = x.shape[0]

    # Batch tile: large to amortize per-step overhead, multiple of 8 for the
    # (8,128) constraint. If the batch would collapse to a single large tile,
    # split it in two so v7x's second TensorCore gets work (grid >= 2).
    TB = min(MAX_TB, _round_up(B, 8))
    if 256 <= B <= MAX_TB:
        TB = _round_up(_cdiv(B, 2), 8)
    Bp = _round_up(B, TB)
    if Bp != B:
        x = jnp.pad(x, ((0, Bp - B), (0, 0)))
    x = x.astype(jnp.bfloat16)   # halve the dominant HBM stream

    grid = Bp // TB
    flops = 2 * Bp * (IN_DIM * HID_P + HID_P * HID_P + HID_P * OUT_P)
    bytes_accessed = (
        Bp * IN_DIM * 2                                           # x (bf16)
        + (IN_DIM * HID_P + HID_P * HID_P + HID_P * OUT_P) * 2    # weights
        + (2 * HID_P + OUT_P) * 4                                 # biases
        + Bp * OUT_P * 2)                                         # out (bf16)

    out = pl.pallas_call(
        mlp_kernel,
        out_shape=jax.ShapeDtypeStruct((Bp, OUT_P), jnp.bfloat16),
        grid_spec=pltpu.PrefetchScalarGridSpec(
            num_scalar_prefetch=0,
            grid=(grid,),
            in_specs=[
                # x tile: pipelined along the batch grid axis.
                pl.BlockSpec((TB, IN_DIM), lambda i: (i, 0)),
                # Weights / biases: constant index_map -> VMEM-resident,
                # DMA'd once per call (not per grid step).
                pl.BlockSpec((IN_DIM, HID_P), lambda i: (0, 0)),
                pl.BlockSpec((1, HID_P), lambda i: (0, 0)),
                pl.BlockSpec((HID_P, HID_P), lambda i: (0, 0)),
                pl.BlockSpec((1, HID_P), lambda i: (0, 0)),
                pl.BlockSpec((HID_P, OUT_P), lambda i: (0, 0)),
                pl.BlockSpec((1, OUT_P), lambda i: (0, 0)),
            ],
            out_specs=pl.BlockSpec((TB, OUT_P), lambda i: (i, 0)),
        ),
        compiler_params=pltpu.CompilerParams(
            # Batch tiles are independent -> parallel (megacore on v7x).
            dimension_semantics=("parallel",),
        ),
        cost_estimate=pl.CostEstimate(
            flops=flops, transcendentals=0, bytes_accessed=bytes_accessed),
    )(x, w1, b1, w2, b2, w3, b3)

    return out[:B, :OUT_DIM].astype(jnp.float32)


def init_params(key):
    # Logical-size f32 params mimicking nn.Linear's U(-1/sqrt(fan_in), +) init.
    k = jax.random.split(key, 6)

    def linear(kw, kb, fan_in, fan_out):
        bound = 1.0 / jnp.sqrt(fan_in)
        w = jax.random.uniform(kw, (fan_in, fan_out), jnp.float32, -bound, bound)
        b = jax.random.uniform(kb, (1, fan_out), jnp.float32, -bound, bound)
        return w, b

    w1, b1 = linear(k[0], k[1], IN_DIM, HID)
    w2, b2 = linear(k[2], k[3], HID, HID)
    w3, b3 = linear(k[4], k[5], HID, OUT_DIM)
    return (w1, b1, w2, b2, w3, b3)


def prepare_params(params):
    """Zero-pad to lane-dense sizes, cast weights to bf16, biases stay f32."""
    w1, b1, w2, b2, w3, b3 = params
    w1p = jnp.pad(w1, ((0, 0), (0, HID_P - HID))).astype(jnp.bfloat16)
    b1p = jnp.pad(b1, ((0, 0), (0, HID_P - HID)))
    w2p = jnp.pad(w2, ((0, HID_P - HID), (0, HID_P - HID))).astype(jnp.bfloat16)
    b2p = jnp.pad(b2, ((0, 0), (0, HID_P - HID)))
    w3p = jnp.pad(w3, ((0, HID_P - HID), (0, OUT_P - OUT_DIM))).astype(jnp.bfloat16)
    b3p = jnp.pad(b3, ((0, 0), (0, OUT_P - OUT_DIM)))
    return (w1p, b1p, w2p, b2p, w3p, b3p)


def reference_forward(x, prepared_params):
    # Same bf16-input/weight, f32-accumulate numerics as the kernel (pure XLA).
    # Output kept in f32 (the kernel's extra bf16 writeback rounding is
    # covered by the comparison tolerance below).
    w1, b1, w2, b2, w3, b3 = prepared_params
    xb = x.astype(jnp.bfloat16)
    z = jnp.maximum(
        jnp.dot(xb, w1, preferred_element_type=jnp.float32) + b1, 0.0)
    f = jnp.maximum(
        jnp.dot(z.astype(jnp.bfloat16), w2, preferred_element_type=jnp.float32) + b2, 0.0)
    y = jnp.maximum(
        jnp.dot(f.astype(jnp.bfloat16), w3, preferred_element_type=jnp.float32) + b3, 0.0)
    return y[:, :OUT_DIM]


if __name__ == "__main__":
    key = jax.random.PRNGKey(0)
    kx, kp = jax.random.split(key)

    B = 8
    x = jax.random.normal(kx, (B, IN_DIM), dtype=jnp.float32)
    params = prepare_params(init_params(kp))

    y = neural_network_forward(x, params)
    y = jax.block_until_ready(y)

    y_ref = reference_forward(x, params)
    assert y.shape == (B, OUT_DIM)
    # Tolerance covers the bf16 output writeback (~0.4% relative).
    assert jnp.allclose(y, y_ref, atol=5e-2, rtol=5e-2)

    print("KERNEL_OK")
</pallas_src>

<mosaic_0001>
module attributes {stable_mosaic.version = 11 : i64} {
  func.func @mlp_kernel(%arg0: i32, %arg1: memref<8x784xbf16, #tpu.memory_space<vmem>>, %arg2: memref<784x256xbf16, #tpu.memory_space<vmem>>, %arg3: memref<1x256xf32, #tpu.memory_space<vmem>>, %arg4: memref<256x256xbf16, #tpu.memory_space<vmem>>, %arg5: memref<1x256xf32, #tpu.memory_space<vmem>>, %arg6: memref<256x128xbf16, #tpu.memory_space<vmem>>, %arg7: memref<1x128xf32, #tpu.memory_space<vmem>>, %arg8: memref<8x128xbf16, #tpu.memory_space<vmem>>) attributes {dimension_semantics = [#tpu.dimension_semantics<parallel>], iteration_bounds = array<i64: 1>, scalar_prefetch = 0 : i64, scratch_operands = 0 : i64, tpu.core_type = #tpu.core_type<tc>, window_params = [{transform_indices = @transform_0, window_bounds = array<i64: 8, 784>}, {pipeline_mode = #tpu.pipeline_mode<synchronous>, transform_indices = @transform_1, window_bounds = array<i64: 784, 256>}, {pipeline_mode = #tpu.pipeline_mode<synchronous>, transform_indices = @transform_2, window_bounds = array<i64: 1, 256>}, {pipeline_mode = #tpu.pipeline_mode<synchronous>, transform_indices = @transform_3, window_bounds = array<i64: 256, 256>}, {pipeline_mode = #tpu.pipeline_mode<synchronous>, transform_indices = @transform_4, window_bounds = array<i64: 1, 256>}, {pipeline_mode = #tpu.pipeline_mode<synchronous>, transform_indices = @transform_5, window_bounds = array<i64: 256, 128>}, {pipeline_mode = #tpu.pipeline_mode<synchronous>, transform_indices = @transform_6, window_bounds = array<i64: 1, 128>}, {transform_indices = @transform_7, window_bounds = array<i64: 8, 128>}]} {
    %c0 = arith.constant 0 : index
    %c0_0 = arith.constant 0 : index
    %0 = vector.load %arg1[%c0, %c0_0] : memref<8x784xbf16, #tpu.memory_space<vmem>>, vector<8x784xbf16>
    %c0_1 = arith.constant 0 : index
    %c0_2 = arith.constant 0 : index
    %1 = vector.load %arg2[%c0_1, %c0_2] : memref<784x256xbf16, #tpu.memory_space<vmem>>, vector<784x256xbf16>
    %cst = arith.constant dense<0.000000e+00> : vector<8x256xf32>
    %2 = tpu.matmul %0, %1, %cst {dimension_numbers = #tpu.dot_dimension_numbers<[1], [0], [0], [1], [0, 0, 1, 1], [], []>} : vector<8x784xbf16>, vector<784x256xbf16>, vector<8x256xf32> -> vector<8x256xf32>
    %c0_3 = arith.constant 0 : index
    %c0_4 = arith.constant 0 : index
    %3 = vector.load %arg3[%c0_3, %c0_4] : memref<1x256xf32, #tpu.memory_space<vmem>>, vector<1x256xf32>
    %4 = vector.broadcast %3 : vector<1x256xf32> to vector<8x256xf32>
    %5 = arith.addf %2, %4 : vector<8x256xf32>
    %cst_5 = arith.constant 0.000000e+00 : f32
    %6 = vector.broadcast %cst_5 : f32 to vector<8x256xf32>
    %7 = arith.maximumf %5, %6 : vector<8x256xf32>
    %8 = arith.truncf %7 : vector<8x256xf32> to vector<8x256xbf16>
    %c0_6 = arith.constant 0 : index
    %c0_7 = arith.constant 0 : index
    %9 = vector.load %arg4[%c0_6, %c0_7] : memref<256x256xbf16, #tpu.memory_space<vmem>>, vector<256x256xbf16>
    %cst_8 = arith.constant dense<0.000000e+00> : vector<8x256xf32>
    %10 = tpu.matmul %8, %9, %cst_8 {dimension_numbers = #tpu.dot_dimension_numbers<[1], [0], [0], [1], [0, 0, 1, 1], [], []>} : vector<8x256xbf16>, vector<256x256xbf16>, vector<8x256xf32> -> vector<8x256xf32>
    %c0_9 = arith.constant 0 : index
    %c0_10 = arith.constant 0 : index
    %11 = vector.load %arg5[%c0_9, %c0_10] : memref<1x256xf32, #tpu.memory_space<vmem>>, vector<1x256xf32>
    %12 = vector.broadcast %11 : vector<1x256xf32> to vector<8x256xf32>
    %13 = arith.addf %10, %12 : vector<8x256xf32>
    %cst_11 = arith.constant 0.000000e+00 : f32
    %14 = vector.broadcast %cst_11 : f32 to vector<8x256xf32>
    %15 = arith.maximumf %13, %14 : vector<8x256xf32>
    %16 = arith.truncf %15 : vector<8x256xf32> to vector<8x256xbf16>
    %c0_12 = arith.constant 0 : index
    %c0_13 = arith.constant 0 : index
    %17 = vector.load %arg6[%c0_12, %c0_13] : memref<256x128xbf16, #tpu.memory_space<vmem>>, vector<256x128xbf16>
    %cst_14 = arith.constant dense<0.000000e+00> : vector<8x128xf32>
    %18 = tpu.matmul %16, %17, %cst_14 {dimension_numbers = #tpu.dot_dimension_numbers<[1], [0], [0], [1], [0, 0, 1, 1], [], []>} : vector<8x256xbf16>, vector<256x128xbf16>, vector<8x128xf32> -> vector<8x128xf32>
    %c0_15 = arith.constant 0 : index
    %c0_16 = arith.constant 0 : index
    %19 = vector.load %arg7[%c0_15, %c0_16] : memref<1x128xf32, #tpu.memory_space<vmem>>, vector<1x128xf32>
    %20 = vector.broadcast %19 : vector<1x128xf32> to vector<8x128xf32>
    %21 = arith.addf %18, %20 : vector<8x128xf32>
    %cst_17 = arith.constant 0.000000e+00 : f32
    %22 = vector.broadcast %cst_17 : f32 to vector<8x128xf32>
    %23 = arith.maximumf %21, %22 : vector<8x128xf32>
    %24 = arith.truncf %23 : vector<8x128xf32> to vector<8x128xbf16>
    %c0_18 = arith.constant 0 : index
    %c0_19 = arith.constant 0 : index
    %25 = vector.load %arg8[%c0_18, %c0_19] : memref<8x128xbf16, #tpu.memory_space<vmem>>, vector<8x128xbf16>
    tpu.vector_store %arg8[%c0_18, %c0_19], %24 {strides = array<i32>} : memref<8x128xbf16, #tpu.memory_space<vmem>>, vector<8x128xbf16>,
    return
  }
  func.func @transform_0(%arg0: i32) -> (i32, i32) {
    %c0_i32 = arith.constant 0 : i32
    %c0_i32_0 = arith.constant 0 : i32
    return %arg0, %c0_i32 : i32, i32
  }
  func.func @transform_1(%arg0: i32) -> (i32, i32) {
    %c0_i32 = arith.constant 0 : i32
    %c0_i32_0 = arith.constant 0 : i32
    %c0_i32_1 = arith.constant 0 : i32
    return %c0_i32, %c0_i32_0 : i32, i32
  }
  func.func @transform_2(%arg0: i32) -> (i32, i32) {
    %c0_i32 = arith.constant 0 : i32
    %c0_i32_0 = arith.constant 0 : i32
    %c0_i32_1 = arith.constant 0 : i32
    return %c0_i32, %c0_i32_0 : i32, i32
  }
  func.func @transform_3(%arg0: i32) -> (i32, i32) {
    %c0_i32 = arith.constant 0 : i32
    %c0_i32_0 = arith.constant 0 : i32
    %c0_i32_1 = arith.constant 0 : i32
    return %c0_i32, %c0_i32_0 : i32, i32
  }
  func.func @transform_4(%arg0: i32) -> (i32, i32) {
    %c0_i32 = arith.constant 0 : i32
    %c0_i32_0 = arith.constant 0 : i32
    %c0_i32_1 = arith.constant 0 : i32
    return %c0_i32, %c0_i32_0 : i32, i32
  }
  func.func @transform_5(%arg0: i32) -> (i32, i32) {
    %c0_i32 = arith.constant 0 : i32
    %c0_i32_0 = arith.constant 0 : i32
    %c0_i32_1 = arith.constant 0 : i32
    return %c0_i32, %c0_i32_0 : i32, i32
  }
  func.func @transform_6(%arg0: i32) -> (i32, i32) {
    %c0_i32 = arith.constant 0 : i32
    %c0_i32_0 = arith.constant 0 : i32
    %c0_i32_1 = arith.constant 0 : i32
    return %c0_i32, %c0_i32_0 : i32, i32
  }
  func.func @transform_7(%arg0: i32) -> (i32, i32) {
    %c0_i32 = arith.constant 0 : i32
    %c0_i32_0 = arith.constant 0 : i32
    return %arg0, %c0_i32 : i32, i32
  }
}

</mosaic_0001>

<llo_original>
// kernel: tpu_custom_call.1
$region0: #{tpu_custom_call.1}
  #allocation0 [shape = 'u32[]', space=smem, size = 0x4, offset = 0x4, fixed_abs, tag = 'smem constant byte address 0x4 - core index']
  #allocation1 [shape = 'u32[72,128]{1,0:T(1,128)}', space=vmem, size = 0x9000, scoped, tag = 'internal scratch']
  %s0 = inlined_call_operand.hbm [shape: bf16[8,784], index: 0, kind: input, shape index: {}]
  %s1 = inlined_call_operand.hbm [shape: bf16[784,256], index: 1, kind: input, shape index: {}]
  %s2 = inlined_call_operand.hbm [shape: f32[1,256], index: 2, kind: input, shape index: {}]
  %s3 = inlined_call_operand.hbm [shape: bf16[256,256], index: 3, kind: input, shape index: {}]
  %s4 = inlined_call_operand.vmem [shape: f32[1,256], index: 4, kind: input, shape index: {}]
  %s5 = inlined_call_operand.hbm [shape: bf16[256,128], index: 5, kind: input, shape index: {}]
  %s6 = inlined_call_operand.vmem [shape: f32[1,128], index: 6, kind: input, shape index: {}]
  %s7 = inlined_call_operand.hbm [shape: bf16[8,128], index: 7, kind: output, shape index: {}]
  %s8 = sld [smem:[#allocation0]]
  $region58: #{tpu_custom_call.1} parent=0
    _
  %s10 = ssub.s32 1, %s8
  %s11 = scalar_select 0, %s10, %s8
  $region1: #{tpu_custom_call.1} parent=0
    #allocation2 [shape = 'u8[14336]{0}', space=vmem, size = 0x3800, scoped, tag = 'input window, operand 0, single buffered']
    #allocation3 [shape = 's32[1]{0}', space=sflag, size = 0x4, scoped, tag = 'scoped memory for tpu_custom_call.1']
    #allocation4 [shape = 's32[1]{0}', space=sflag, size = 0x4, scoped, tag = 'scoped memory for tpu_custom_call.1']
    #allocation5 [shape = 'u8[401408]{0}', space=vmem, size = 0x62000, scoped, tag = 'input window, operand 1, single buffered']
    #allocation6 [shape = 's32[1]{0}', space=sflag, size = 0x4, scoped, tag = 'scoped memory for tpu_custom_call.1']
    #allocation7 [shape = 'u8[1024]{0}', space=vmem, size = 0x400, scoped, tag = 'input window, operand 2, single buffered']
    #allocation8 [shape = 'u8[131072]{0}', space=vmem, size = 0x20000, scoped, tag = 'input window, operand 3, single buffered']
    #allocation9 [shape = 's32[1]{0}', space=sflag, size = 0x4, scoped, tag = 'scoped memory for tpu_custom_call.1']
    #allocation10 [shape = 'u8[65536]{0}', space=vmem, size = 0x10000, scoped, tag = 'input window, operand 5, single buffered']
    #allocation11 [shape = 'u8[2048]{0}', space=vmem, size = 0x800, scoped, tag = 'output window, operand 0, single buffered']
    %12 = vsyncpa [#allocation3], 0
    %13 = vsyncpa [#allocation6], 0
    %14 = vsyncpa [#allocation9], 0
    %15 = vsyncpa [#allocation4], 0
    // Predicated region
    $region2: #{tpu_custom_call.1} parent=1 // pred_check
      _
    $region3: #{tpu_custom_call.1} parent=1 // pred_check_branch
      %17 = sbr.rel (0) target = $region5
    $region4: #{tpu_custom_call.1} parent=1 // pred_region
      %19 = vsyncadd [#allocation3], 0
      %s21 = sshll.u32 %s0, 4
      %s22 = int_to_ptr.hbm [resolvable:$true] %s21
      %s23 = sshll.u32 [#allocation2], 4
      %s24 = int_to_ptr.vmem [resolvable:$true] %s23
      %26 = dma.hbm_to_vmem [thread:$0]  %s22, 448, %s24, [#allocation3]
    $region5: #{tpu_custom_call.1} parent=1 // pred_fallthru
      _
    // Predicated region
    $region6: #{tpu_custom_call.1} parent=1 // pred_check
      _
    $region7: #{tpu_custom_call.1} parent=1 // pred_check_branch
      %28 = sbr.rel (0) target = $region9
    $region8: #{tpu_custom_call.1} parent=1 // pred_region
      %30 = vsyncadd [#allocation6], 0
      %s31 = sshll.u32 %s1, 4
      %s32 = int_to_ptr.hbm [resolvable:$true] %s31
      %s33 = sshll.u32 [#allocation5], 4
      %s34 = int_to_ptr.vmem [resolvable:$true] %s33
      %39 = dma.hbm_to_vmem [thread:$0]  %s32, 12544, %s34, [#allocation6], 128, 128, 8
    $region9: #{tpu_custom_call.1} parent=1 // pred_fallthru
      _
    // Predicated region
    $region10: #{tpu_custom_call.1} parent=1 // pred_check
      _
    $region11: #{tpu_custom_call.1} parent=1 // pred_check_branch
      %41 = sbr.rel (0) target = $region13
    $region12: #{tpu_custom_call.1} parent=1 // pred_region
      %43 = vsyncadd [#allocation6], 0
      %s45 = sshll.u32 %s2, 4
      %s46 = int_to_ptr.hbm [resolvable:$true] %s45
      %s47 = sshll.u32 [#allocation7], 4
      %s48 = int_to_ptr.vmem [resolvable:$true] %s47
      %50 = dma.hbm_to_vmem [thread:$0]  %s46, 32, %s48, [#allocation6]
    $region13: #{tpu_custom_call.1} parent=1 // pred_fallthru
      _
    // Predicated region
    $region14: #{tpu_custom_call.1} parent=1 // pred_check
      _
    $region15: #{tpu_custom_call.1} parent=1 // pred_check_branch
      %52 = sbr.rel (0) target = $region17
    $region16: #{tpu_custom_call.1} parent=1 // pred_region
      %54 = vsyncadd [#allocation9], 0
      %s55 = sshll.u32 %s3, 4
      %s56 = int_to_ptr.hbm [resolvable:$true] %s55
      %s57 = sshll.u32 [#allocation8], 4
      %s58 = int_to_ptr.vmem [resolvable:$true] %s57
      %63 = dma.hbm_to_vmem [thread:$0]  %s56, 4096, %s58, [#allocation9], 128, 128, 8
    $region17: #{tpu_custom_call.1} parent=1 // pred_fallthru
      _
    // Predicated region
    $region18: #{tpu_custom_call.1} parent=1 // pred_check
      _
    $region19: #{tpu_custom_call.1} parent=1 // pred_check_branch
      %65 = sbr.rel (0) target = $region21
    $region20: #{tpu_custom_call.1} parent=1 // pred_region
      _
    $region21: #{tpu_custom_call.1} parent=1 // pred_fallthru
      _
    // Predicated region
    $region22: #{tpu_custom_call.1} parent=1 // pred_check
      _
    $region23: #{tpu_custom_call.1} parent=1 // pred_check_branch
      %67 = sbr.rel (0) target = $region25
    $region24: #{tpu_custom_call.1} parent=1 // pred_region
      %69 = vsyncadd [#allocation9], 0
      %s70 = sshll.u32 %s5, 4
      %s71 = int_to_ptr.hbm [resolvable:$true] %s70
      %s72 = sshll.u32 [#allocation10], 4
      %s73 = int_to_ptr.vmem [resolvable:$true] %s72
      %78 = dma.hbm_to_vmem [thread:$0]  %s71, 2048, %s73, [#allocation9], 64, 64, 4
    $region25: #{tpu_custom_call.1} parent=1 // pred_fallthru
      _
    // Predicated region
    $region26: #{tpu_custom_call.1} parent=1 // pred_check
      _
    $region27: #{tpu_custom_call.1} parent=1 // pred_check_branch
      %80 = sbr.rel (0) target = $region29
    $region28: #{tpu_custom_call.1} parent=1 // pred_region
      _
    $region29: #{tpu_custom_call.1} parent=1 // pred_fallthru
      _
    // Predicated region
    $region30: #{tpu_custom_call.1} parent=1 // pred_check
      _
    $region31: #{tpu_custom_call.1} parent=1 // pred_check_branch
      %82 = sbr.rel (0) target = $region33
    $region32: #{tpu_custom_call.1} parent=1 // pred_region
      %84 = dma.done [#allocation3], 448
    $region33: #{tpu_custom_call.1} parent=1 // pred_fallthru
      _
    // Predicated region
    $region34: #{tpu_custom_call.1} parent=1 // pred_check
      _
    $region35: #{tpu_custom_call.1} parent=1 // pred_check_branch
      %86 = sbr.rel (0) target = $region37
    $region36: #{tpu_custom_call.1} parent=1 // pred_region
      %88 = dma.done [#allocation6], 12544
    $region37: #{tpu_custom_call.1} parent=1 // pred_fallthru
      _
    // Predicated region
    $region38: #{tpu_custom_call.1} parent=1 // pred_check
      _
    $region39: #{tpu_custom_call.1} parent=1 // pred_check_branch
      %90 = sbr.rel (0) target = $region41
    $region40: #{tpu_custom_call.1} parent=1 // pred_region
      %92 = dma.done [#allocation6], 32
    $region41: #{tpu_custom_call.1} parent=1 // pred_fallthru
      _
    // Predicated region
    $region42: #{tpu_custom_call.1} parent=1 // pred_check
      _
    $region43: #{tpu_custom_call.1} parent=1 // pred_check_branch
      %94 = sbr.rel (0) target = $region45
    $region44: #{tpu_custom_call.1} parent=1 // pred_region
      %96 = dma.done [#allocation9], 4096
    $region45: #{tpu_custom_call.1} parent=1 // pred_fallthru
      _
    // Predicated region
    $region46: #{tpu_custom_call.1} parent=1 // pred_check
      _
    $region47: #{tpu_custom_call.1} parent=1 // pred_check_branch
      %98 = sbr.rel (0) target = $region49
    $region48: #{tpu_custom_call.1} parent=1 // pred_region
      %100 = dma.done [#allocation9], 2048
    $region49: #{tpu_custom_call.1} parent=1 // pred_fallthru
      _
    %v102 = vld [vmem:[#allocation2] sm:$0xff]
    %v103 = vld [vmem:[#allocation2 + $0x8] sm:$0xff]
    %v104 = vld [vmem:[#allocation2 + $0x10] sm:$0xff]
    %v105 = vld [vmem:[#allocation2 + $0x18] sm:$0xf]
    %v106 = vld [vmem:[#allocation5] sm:$0xff]
    %v107 = vld [vmem:[#allocation5 + $0x8] sm:$0xff]
    %v108 = vld [vmem:[#allocation5 + $0x10] sm:$0xff]
    %v109 = vld [vmem:[#allocation5 + $0x18] sm:$0xff]
    %v110 = vld [vmem:[#allocation5 + $0x20] sm:$0xff]
    %v111 = vld [vmem:[#allocation5 + $0x28] sm:$0xff]
    %v112 = vld [vmem:[#allocation5 + $0x30] sm:$0xff]
    %v113 = vld [vmem:[#allocation5 + $0x38] sm:$0xff]
    %v114 = vld [vmem:[#allocation5 + $0x40] sm:$0xff]
    %v115 = vld [vmem:[#allocation5 + $0x48] sm:$0xff]
    %v116 = vld [vmem:[#allocation5 + $0x50] sm:$0xff]
    %v117 = vld [vmem:[#allocation5 + $0x58] sm:$0xff]
    %v118 = vld [vmem:[#allocation5 + $0x60] sm:$0xff]
    %v119 = vld [vmem:[#allocation5 + $0x68] sm:$0xff]
    %v120 = vld [vmem:[#allocation5 + $0x70] sm:$0xff]
    %v121 = vld [vmem:[#allocation5 + $0x78] sm:$0xff]
    %v122 = vld [vmem:[#allocation5 + $0x80] sm:$0xff]
    %v123 = vld [vmem:[#allocation5 + $0x88] sm:$0xff]
    %v124 = vld [vmem:[#allocation5 + $0x90] sm:$0xff]
    %v125 = vld [vmem:[#allocation5 + $0x98] sm:$0xff]
    %v126 = vld [vmem:[#allocation5 + $0xa0] sm:$0xff]
    %v127 = vld [vmem:[#allocation5 + $0xa8] sm:$0xff]
    %v128 = vld [vmem:[#allocation5 + $0xb0] sm:$0xff]
    %v129 = vld [vmem:[#allocation5 + $0xb8] sm:$0xff]
    %v130 = vld [vmem:[#allocation5 + $0xc0] sm:$0xff]
    %v131 = vld [vmem:[#allocation5 + $0xc8] sm:$0xff]
    %v132 = vld [vmem:[#allocation5 + $0xd0] sm:$0xff]
    %v133 = vld [vmem:[#allocation5 + $0xd8] sm:$0xff]
    %v134 = vld [vmem:[#allocation5 + $0xe0] sm:$0xff]
    %v135 = vld [vmem:[#allocation5 + $0xe8] sm:$0xff]
    %v136 = vld [vmem:[#allocation5 + $0xf0] sm:$0xff]
    %v137 = vld [vmem:[#allocation5 + $0xf8] sm:$0xff]
    %v138 = vld [vmem:[#allocation5 + $0x100] sm:$0xff]
    %v139 = vld [vmem:[#allocation5 + $0x108] sm:$0xff]
    %v140 = vld [vmem:[#allocation5 + $0x110] sm:$0xff]
    %v141 = vld [vmem:[#allocation5 + $0x118] sm:$0xff]
    %v142 = vld [vmem:[#allocation5 + $0x120] sm:$0xff]
    %v143 = vld [vmem:[#allocation5 + $0x128] sm:$0xff]
    %v144 = vld [vmem:[#allocation5 + $0x130] sm:$0xff]
    %v145 = vld [vmem:[#allocation5 + $0x138] sm:$0xff]
    %v146 = vld [vmem:[#allocation5 + $0x140] sm:$0xff]
    %v147 = vld [vmem:[#allocation5 + $0x148] sm:$0xff]
    %v148 = vld [vmem:[#allocation5 + $0x150] sm:$0xff]
    %v149 = vld [vmem:[#allocation5 + $0x158] sm:$0xff]
    %v150 = vld [vmem:[#allocation5 + $0x160] sm:$0xff]
    %v151 = vld [vmem:[#allocation5 + $0x168] sm:$0xff]
    %v152 = vld [vmem:[#allocation5 + $0x170] sm:$0xff]
    %v153 = vld [vmem:[#allocation5 + $0x178] sm:$0xff]
    %v154 = vld [vmem:[#allocation5 + $0x180] sm:$0xff]
    %v155 = vld [vmem:[#allocation5 + $0x188] sm:$0xff]
    %v156 = vld [vmem:[#allocation5 + $0x190] sm:$0xff]
    %v157 = vld [vmem:[#allocation5 + $0x198] sm:$0xff]
    %v158 = vld [vmem:[#allocation5 + $0x1a0] sm:$0xff]
    %v159 = vld [vmem:[#allocation5 + $0x1a8] sm:$0xff]
    %v160 = vld [vmem:[#allocation5 + $0x1b0] sm:$0xff]
    %v161 = vld [vmem:[#allocation5 + $0x1b8] sm:$0xff]
    %v162 = vld [vmem:[#allocation5 + $0x1c0] sm:$0xff]
    %v163 = vld [vmem:[#allocation5 + $0x1c8] sm:$0xff]
    %v164 = vld [vmem:[#allocation5 + $0x1d0] sm:$0xff]
    %v165 = vld [vmem:[#allocation5 + $0x1d8] sm:$0xff]
    %v166 = vld [vmem:[#allocation5 + $0x1e0] sm:$0xff]
    %v167 = vld [vmem:[#allocation5 + $0x1e8] sm:$0xff]
    %v168 = vld [vmem:[#allocation5 + $0x1f0] sm:$0xff]
    %v169 = vld [vmem:[#allocation5 + $0x1f8] sm:$0xff]
    %v170 = vld [vmem:[#allocation5 + $0x200] sm:$0xff]
    %v171 = vld [vmem:[#allocation5 + $0x208] sm:$0xff]
    %v172 = vld [vmem:[#allocation5 + $0x210] sm:$0xff]
    %v173 = vld [vmem:[#allocation5 + $0x218] sm:$0xff]
    %v174 = vld [vmem:[#allocation5 + $0x220] sm:$0xff]
    %v175 = vld [vmem:[#allocation5 + $0x228] sm:$0xff]
    %v176 = vld [vmem:[#allocation5 + $0x230] sm:$0xff]
    %v177 = vld [vmem:[#allocation5 + $0x238] sm:$0xff]
    %v178 = vld [vmem:[#allocation5 + $0x240] sm:$0xff]
    %v179 = vld [vmem:[#allocation5 + $0x248] sm:$0xff]
    %v180 = vld [vmem:[#allocation5 + $0x250] sm:$0xff]
    %v181 = vld [vmem:[#allocation5 + $0x258] sm:$0xff]
    %v182 = vld [vmem:[#allocation5 + $0x260] sm:$0xff]
    %v183 = vld [vmem:[#allocation5 + $0x268] sm:$0xff]
    %v184 = vld [vmem:[#allocation5 + $0x270] sm:$0xff]
    %v185 = vld [vmem:[#allocation5 + $0x278] sm:$0xff]
    %v186 = vld [vmem:[#allocation5 + $0x280] sm:$0xff]
    %v187 = vld [vmem:[#allocation5 + $0x288] sm:$0xff]
    %v188 = vld [vmem:[#allocation5 + $0x290] sm:$0xff]
    %v189 = vld [vmem:[#allocation5 + $0x298] sm:$0xff]
    %v190 = vld [vmem:[#allocation5 + $0x2a0] sm:$0xff]
    %v191 = vld [vmem:[#allocation5 + $0x2a8] sm:$0xff]
    %v192 = vld [vmem:[#allocation5 + $0x2b0] sm:$0xff]
    %v193 = vld [vmem:[#allocation5 + $0x2b8] sm:$0xff]
    %v194 = vld [vmem:[#allocation5 + $0x2c0] sm:$0xff]
    %v195 = vld [vmem:[#allocation5 + $0x2c8] sm:$0xff]
    %v196 = vld [vmem:[#allocation5 + $0x2d0] sm:$0xff]
    %v197 = vld [vmem:[#allocation5 + $0x2d8] sm:$0xff]
    %v198 = vld [vmem:[#allocation5 + $0x2e0] sm:$0xff]
    %v199 = vld [vmem:[#allocation5 + $0x2e8] sm:$0xff]
    %v200 = vld [vmem:[#allocation5 + $0x2f0] sm:$0xff]
    %v201 = vld [vmem:[#allocation5 + $0x2f8] sm:$0xff]
    %v202 = vld [vmem:[#allocation5 + $0x300] sm:$0xff]
    %v203 = vld [vmem:[#allocation5 + $0x308] sm:$0xff]
    %v204 = vld [vmem:[#allocation7] sm:$0x3]
    %v206 = vperm.slane %v204, 0
    %v207 = vperm.slane %v204, 1
    %v214 = vunpack.c.l.b16 %v102
    %v215 = vunpack.c.h.b16 %v102
    %v216 = vunpack.c.l.b16 %v103
    %v217 = vunpack.c.h.b16 %v103
    %v218 = vunpack.c.l.b16 %v104
    %v219 = vunpack.c.h.b16 %v104
    %v220 = vunpack.c.l.b16 %v105
    %v221 = vpack.c.b16 %v214, %v214
    %v222 = vpack.c.b16 %v215, %v215
    %v223 = vpack.c.b16 %v216, %v216
    %v224 = vpack.c.b16 %v217, %v217
    %v225 = vpack.c.b16 %v218, %v218
    %v226 = vpack.c.b16 %v219, %v219
    %v227 = vpack.c.b16 %v220, %v220
    %v332 = vunpack.c.l.b16 %v106
    %v333 = vunpack.c.h.b16 %v106
    %v334 = vunpack.c.l.b16 %v107
    %v335 = vunpack.c.h.b16 %v107
    %v336 = vunpack.c.l.b16 %v108
    %v337 = vunpack.c.h.b16 %v108
    %v338 = vunpack.c.l.b16 %v109
    %v339 = vunpack.c.h.b16 %v109
    %v340 = vunpack.c.l.b16 %v110
    %v341 = vunpack.c.h.b16 %v110
    %v342 = vunpack.c.l.b16 %v111
    %v343 = vunpack.c.h.b16 %v111
    %v344 = vunpack.c.l.b16 %v112
    %v345 = vunpack.c.h.b16 %v112
    %v346 = vunpack.c.l.b16 %v113
    %v347 = vunpack.c.h.b16 %v113
    %v348 = vunpack.c.l.b16 %v114
    %v349 = vunpack.c.h.b16 %v114
    %v350 = vunpack.c.l.b16 %v115
    %v351 = vunpack.c.h.b16 %v115
    %v352 = vunpack.c.l.b16 %v116
    %v353 = vunpack.c.h.b16 %v116
    %v354 = vunpack.c.l.b16 %v117
    %v355 = vunpack.c.h.b16 %v117
    %v356 = vunpack.c.l.b16 %v118
    %v357 = vunpack.c.h.b16 %v118
    %v358 = vunpack.c.l.b16 %v119
    %v359 = vunpack.c.h.b16 %v119
    %v360 = vunpack.c.l.b16 %v120
    %v361 = vunpack.c.h.b16 %v120
    %v362 = vunpack.c.l.b16 %v121
    %v363 = vunpack.c.h.b16 %v121
    %v364 = vunpack.c.l.b16 %v122
    %v365 = vunpack.c.h.b16 %v122
    %v366 = vunpack.c.l.b16 %v123
    %v367 = vunpack.c.h.b16 %v123
    %v368 = vunpack.c.l.b16 %v124
    %v369 = vunpack.c.h.b16 %v124
    %v370 = vunpack.c.l.b16 %v125
    %v371 = vunpack.c.h.b16 %v125
    %v372 = vunpack.c.l.b16 %v126
    %v373 = vunpack.c.h.b16 %v126
    %v374 = vunpack.c.l.b16 %v127
    %v375 = vunpack.c.h.b16 %v127
    %v376 = vunpack.c.l.b16 %v128
    %v377 = vunpack.c.h.b16 %v128
    %v378 = vunpack.c.l.b16 %v129
    %v379 = vunpack.c.h.b16 %v129
    %v380 = vunpack.c.l.b16 %v130
    %v381 = vunpack.c.h.b16 %v130
    %v382 = vunpack.c.l.b16 %v131
    %v383 = vunpack.c.h.b16 %v131
    %v384 = vunpack.c.l.b16 %v132
    %v385 = vunpack.c.h.b16 %v132
    %v386 = vunpack.c.l.b16 %v133
    %v387 = vunpack.c.h.b16 %v133
    %v388 = vunpack.c.l.b16 %v134
    %v389 = vunpack.c.h.b16 %v134
    %v390 = vunpack.c.l.b16 %v135
    %v391 = vunpack.c.h.b16 %v135
    %v392 = vunpack.c.l.b16 %v136
    %v393 = vunpack.c.h.b16 %v136
    %v394 = vunpack.c.l.b16 %v137
    %v395 = vunpack.c.h.b16 %v137
    %v396 = vunpack.c.l.b16 %v138
    %v397 = vunpack.c.h.b16 %v138
    %v398 = vunpack.c.l.b16 %v139
    %v399 = vunpack.c.h.b16 %v139
    %v400 = vunpack.c.l.b16 %v140
    %v401 = vunpack.c.h.b16 %v140
    %v402 = vunpack.c.l.b16 %v141
    %v403 = vunpack.c.h.b16 %v141
    %v404 = vunpack.c.l.b16 %v142
    %v405 = vunpack.c.h.b16 %v142
    %v406 = vunpack.c.l.b16 %v143
    %v407 = vunpack.c.h.b16 %v143
    %v408 = vunpack.c.l.b16 %v144
    %v409 = vunpack.c.h.b16 %v144
    %v410 = vunpack.c.l.b16 %v145
    %v411 = vunpack.c.h.b16 %v145
    %v412 = vunpack.c.l.b16 %v146
    %v413 = vunpack.c.h.b16 %v146
    %v414 = vunpack.c.l.b16 %v147
    %v415 = vunpack.c.h.b16 %v147
    %v416 = vunpack.c.l.b16 %v148
    %v417 = vunpack.c.h.b16 %v148
    %v418 = vunpack.c.l.b16 %v149
    %v419 = vunpack.c.h.b16 %v149
    %v420 = vunpack.c.l.b16 %v150
    %v421 = vunpack.c.h.b16 %v150
    %v422 = vunpack.c.l.b16 %v151
    %v423 = vunpack.c.h.b16 %v151
    %v424 = vunpack.c.l.b16 %v152
    %v425 = vunpack.c.h.b16 %v152
    %v426 = vunpack.c.l.b16 %v153
    %v427 = vunpack.c.h.b16 %v153
    %v428 = vunpack.c.l.b16 %v154
    %v429 = vunpack.c.h.b16 %v154
    %v430 = vunpack.c.l.b16 %v155
    %v431 = vunpack.c.h.b16 %v155
    %v432 = vunpack.c.l.b16 %v156
    %v433 = vunpack.c.h.b16 %v156
    %v434 = vunpack.c.l.b16 %v157
    %v435 = vunpack.c.h.b16 %v157
    %v436 = vunpack.c.l.b16 %v158
    %v437 = vunpack.c.h.b16 %v158
    %v438 = vunpack.c.l.b16 %v159
    %v439 = vunpack.c.h.b16 %v159
    %v440 = vunpack.c.l.b16 %v160
    %v441 = vunpack.c.h.b16 %v160
    %v442 = vunpack.c.l.b16 %v161
    %v443 = vunpack.c.h.b16 %v161
    %v444 = vunpack.c.l.b16 %v162
    %v445 = vunpack.c.h.b16 %v162
    %v446 = vunpack.c.l.b16 %v163
    %v447 = vunpack.c.h.b16 %v163
    %v448 = vunpack.c.l.b16 %v164
    %v449 = vunpack.c.h.b16 %v164
    %v450 = vunpack.c.l.b16 %v165
    %v451 = vunpack.c.h.b16 %v165
    %v452 = vunpack.c.l.b16 %v166
    %v453 = vunpack.c.h.b16 %v166
    %v454 = vunpack.c.l.b16 %v167
    %v455 = vunpack.c.h.b16 %v167
    %v456 = vunpack.c.l.b16 %v168
    %v457 = vunpack.c.h.b16 %v168
    %v458 = vunpack.c.l.b16 %v169
    %v459 = vunpack.c.h.b16 %v169
    %v460 = vunpack.c.l.b16 %v170
    %v461 = vunpack.c.h.b16 %v170
    %v462 = vunpack.c.l.b16 %v171
    %v463 = vunpack.c.h.b16 %v171
    %v464 = vunpack.c.l.b16 %v172
    %v465 = vunpack.c.h.b16 %v172
    %v466 = vunpack.c.l.b16 %v173
    %v467 = vunpack.c.h.b16 %v173
    %v468 = vunpack.c.l.b16 %v174
    %v469 = vunpack.c.h.b16 %v174
    %v470 = vunpack.c.l.b16 %v175
    %v471 = vunpack.c.h.b16 %v175
    %v472 = vunpack.c.l.b16 %v176
    %v473 = vunpack.c.h.b16 %v176
    %v474 = vunpack.c.l.b16 %v177
    %v475 = vunpack.c.h.b16 %v177
    %v476 = vunpack.c.l.b16 %v178
    %v477 = vunpack.c.h.b16 %v178
    %v478 = vunpack.c.l.b16 %v179
    %v479 = vunpack.c.h.b16 %v179
    %v480 = vunpack.c.l.b16 %v180
    %v481 = vunpack.c.h.b16 %v180
    %v482 = vunpack.c.l.b16 %v181
    %v483 = vunpack.c.h.b16 %v181
    %v484 = vunpack.c.l.b16 %v182
    %v485 = vunpack.c.h.b16 %v182
    %v486 = vunpack.c.l.b16 %v183
    %v487 = vunpack.c.h.b16 %v183
    %v488 = vunpack.c.l.b16 %v184
    %v489 = vunpack.c.h.b16 %v184
    %v490 = vunpack.c.l.b16 %v185
    %v491 = vunpack.c.h.b16 %v185
    %v492 = vunpack.c.l.b16 %v186
    %v493 = vunpack.c.h.b16 %v186
    %v494 = vunpack.c.l.b16 %v187
    %v495 = vunpack.c.h.b16 %v187
    %v496 = vunpack.c.l.b16 %v188
    %v497 = vunpack.c.h.b16 %v188
    %v498 = vunpack.c.l.b16 %v189
    %v499 = vunpack.c.h.b16 %v189
    %v500 = vunpack.c.l.b16 %v190
    %v501 = vunpack.c.h.b16 %v190
    %v502 = vunpack.c.l.b16 %v191
    %v503 = vunpack.c.h.b16 %v191
    %v504 = vunpack.c.l.b16 %v192
    %v505 = vunpack.c.h.b16 %v192
    %v506 = vunpack.c.l.b16 %v193
    %v507 = vunpack.c.h.b16 %v193
    %v508 = vunpack.c.l.b16 %v194
    %v509 = vunpack.c.h.b16 %v194
    %v510 = vunpack.c.l.b16 %v195
    %v511 = vunpack.c.h.b16 %v195
    %v512 = vunpack.c.l.b16 %v196
    %v513 = vunpack.c.h.b16 %v196
    %v514 = vunpack.c.l.b16 %v197
    %v515 = vunpack.c.h.b16 %v197
    %v516 = vunpack.c.l.b16 %v198
    %v517 = vunpack.c.h.b16 %v198
    %v518 = vunpack.c.l.b16 %v199
    %v519 = vunpack.c.h.b16 %v199
    %v520 = vunpack.c.l.b16 %v200
    %v521 = vunpack.c.h.b16 %v200
    %v522 = vunpack.c.l.b16 %v201
    %v523 = vunpack.c.h.b16 %v201
    %v524 = vunpack.c.l.b16 %v202
    %v525 = vunpack.c.h.b16 %v202
    %v526 = vunpack.c.l.b16 %v203
    %v527 = vunpack.c.h.b16 %v203
    %v528 = vpack.c.b16 %v334, %v332
    %v529 = vpack.c.b16 %v335, %v333
    %v530 = vpack.c.b16 %v338, %v336
    %v531 = vpack.c.b16 %v339, %v337
    %v532 = vpack.c.b16 %v342, %v340
    %v533 = vpack.c.b16 %v343, %v341
    %v534 = vpack.c.b16 %v346, %v344
    %v535 = vpack.c.b16 %v347, %v345
    %v536 = vpack.c.b16 %v350, %v348
    %v537 = vpack.c.b16 %v351, %v349
    %v538 = vpack.c.b16 %v354, %v352
    %v539 = vpack.c.b16 %v355, %v353
    %v540 = vpack.c.b16 %v358, %v356
    %v541 = vpack.c.b16 %v359, %v357
    %v542 = vpack.c.b16 %v362, %v360
    %v543 = vpack.c.b16 %v363, %v361
    %v544 = vpack.c.b16 %v366, %v364
    %v545 = vpack.c.b16 %v367, %v365
    %v546 = vpack.c.b16 %v370, %v368
    %v547 = vpack.c.b16 %v371, %v369
    %v548 = vpack.c.b16 %v374, %v372
    %v549 = vpack.c.b16 %v375, %v373
    %v550 = vpack.c.b16 %v378, %v376
    %v551 = vpack.c.b16 %v379, %v377
    %v552 = vpack.c.b16 %v382, %v380
    %v553 = vpack.c.b16 %v383, %v381
    %v554 = vpack.c.b16 %v386, %v384
    %v555 = vpack.c.b16 %v387, %v385
    %v556 = vpack.c.b16 %v390, %v388
    %v557 = vpack.c.b16 %v391, %v389
    %v558 = vpack.c.b16 %v394, %v392
    %v559 = vpack.c.b16 %v395, %v393
    %v560 = vpack.c.b16 %v398, %v396
    %v561 = vpack.c.b16 %v399, %v397
    %v562 = vpack.c.b16 %v402, %v400
    %v563 = vpack.c.b16 %v403, %v401
    %v564 = vpack.c.b16 %v406, %v404
    %v565 = vpack.c.b16 %v407, %v405
    %v566 = vpack.c.b16 %v410, %v408
    %v567 = vpack.c.b16 %v411, %v409
    %v568 = vpack.c.b16 %v414, %v412
    %v569 = vpack.c.b16 %v415, %v413
    %v570 = vpack.c.b16 %v418, %v416
    %v571 = vpack.c.b16 %v419, %v417
    %v572 = vpack.c.b16 %v422, %v420
    %v573 = vpack.c.b16 %v423, %v421
    %v574 = vpack.c.b16 %v426, %v424
    %v575 = vpack.c.b16 %v427, %v425
    %v576 = vpack.c.b16 %v430, %v428
    %v577 = vpack.c.b16 %v431, %v429
    %v578 = vpack.c.b16 %v434, %v432
    %v579 = vpack.c.b16 %v435, %v433
    %v580 = vpack.c.b16 %v438, %v436
    %v581 = vpack.c.b16 %v439, %v437
    %v582 = vpack.c.b16 %v442, %v440
    %v583 = vpack.c.b16 %v443, %v441
    %v584 = vpack.c.b16 %v446, %v444
    %v585 = vpack.c.b16 %v447, %v445
    %v586 = vpack.c.b16 %v450, %v448
    %v587 = vpack.c.b16 %v451, %v449
    %v588 = vpack.c.b16 %v454, %v452
    %v589 = vpack.c.b16 %v455, %v453
    %v590 = vpack.c.b16 %v458, %v456
    %v591 = vpack.c.b16 %v459, %v457
    %v592 = vpack.c.b16 %v462, %v460
    %v593 = vpack.c.b16 %v463, %v461
    %v594 = vpack.c.b16 %v466, %v464
    %v595 = vpack.c.b16 %v467, %v465
    %v596 = vpack.c.b16 %v470, %v468
    %v597 = vpack.c.b16 %v471, %v469
    %v598 = vpack.c.b16 %v474, %v472
    %v599 = vpack.c.b16 %v475, %v473
    %v600 = vpack.c.b16 %v478, %v476
    %v601 = vpack.c.b16 %v479, %v477
    %v602 = vpack.c.b16 %v482, %v480
    %v603 = vpack.c.b16 %v483, %v481
    %v604 = vpack.c.b16 %v486, %v484
    %v605 = vpack.c.b16 %v487, %v485
    %v606 = vpack.c.b16 %v490, %v488
    %v607 = vpack.c.b16 %v491, %v489
    %v608 = vpack.c.b16 %v494, %v492
    %v609 = vpack.c.b16 %v495, %v493
    %v610 = vpack.c.b16 %v498, %v496
    %v611 = vpack.c.b16 %v499, %v497
    %v612 = vpack.c.b16 %v502, %v500
    %v613 = vpack.c.b16 %v503, %v501
    %v614 = vpack.c.b16 %v506, %v504
    %v615 = vpack.c.b16 %v507, %v505
    %v616 = vpack.c.b16 %v510, %v508
    %v617 = vpack.c.b16 %v511, %v509
    %v618 = vpack.c.b16 %v514, %v512
    %v619 = vpack.c.b16 %v515, %v513
    %v620 = vpack.c.b16 %v518, %v516
    %v621 = vpack.c.b16 %v519, %v517
    %v622 = vpack.c.b16 %v522, %v520
    %v623 = vpack.c.b16 %v523, %v521
    %v624 = vpack.c.b16 %v526, %v524
    %v625 = vpack.c.b16 %v527, %v525
    %vm724 = vcmask 130048
    %v726 = vsel %vm724, %v227, 0
    %728 = vmatpush.bf16.msra.mxu0 %v542
    %729 = vmatpush.bf16.msra.mxu0 %v540
    %730 = vmatpush.bf16.msra.mxu0 %v538
    %731 = vmatpush.bf16.msra.mxu0 %v536
    %732 = vmatpush.bf16.msra.mxu0 %v534
    %733 = vmatpush.bf16.msra.mxu0 %v532
    %734 = vmatpush.bf16.msra.mxu0 %v530
    %735 = vmatpush.bf16.msra.mxu0 %v528
    %736 = vmatmul.bf16.gmra.mxu0 %v221
    %v737 = vpop.f32.mrf.mxu0
    %v738 = vadd.f32 %v206, %v737
    %v739 = vpop.f32.mrf.mxu0
    %740 = vdwg.mxu0
    %741 = vmatpush.bf16.msra.mxu0 %v558
    %742 = vmatpush.bf16.msra.mxu0 %v556
    %743 = vmatpush.bf16.msra.mxu0 %v554
    %744 = vmatpush.bf16.msra.mxu0 %v552
    %745 = vmatpush.bf16.msra.mxu0 %v550
    %746 = vmatpush.bf16.msra.mxu0 %v548
    %747 = vmatpush.bf16.msra.mxu0 %v546
    %748 = vmatpush.bf16.msra.mxu0 %v544
    %749 = vmatmul.bf16.gmra.mxu0 %v222
    %v750 = vpop.f32.mrf.mxu0
    %v751 = vadd.f32 %v738, %v750
    %v752 = vpop.f32.mrf.mxu0
    %753 = vdwg.mxu0
    %754 = vmatpush.bf16.msra.mxu0 %v574
    %755 = vmatpush.bf16.msra.mxu0 %v572
    %756 = vmatpush.bf16.msra.mxu0 %v570
    %757 = vmatpush.bf16.msra.mxu0 %v568
    %758 = vmatpush.bf16.msra.mxu0 %v566
    %759 = vmatpush.bf16.msra.mxu0 %v564
    %760 = vmatpush.bf16.msra.mxu0 %v562
    %761 = vmatpush.bf16.msra.mxu0 %v560
    %762 = vmatmul.bf16.gmra.mxu0 %v223
    %v763 = vpop.f32.mrf.mxu0
    %v764 = vadd.f32 %v751, %v763
    %v765 = vpop.f32.mrf.mxu0
    %766 = vdwg.mxu0
    %767 = vmatpush.bf16.msra.mxu0 %v590
    %768 = vmatpush.bf16.msra.mxu0 %v588
    %769 = vmatpush.bf16.msra.mxu0 %v586
    %770 = vmatpush.bf16.msra.mxu0 %v584
    %771 = vmatpush.bf16.msra.mxu0 %v582
    %772 = vmatpush.bf16.msra.mxu0 %v580
    %773 = vmatpush.bf16.msra.mxu0 %v578
    %774 = vmatpush.bf16.msra.mxu0 %v576
    %775 = vmatmul.bf16.gmra.mxu0 %v224
    %v776 = vpop.f32.mrf.mxu0
    %v777 = vadd.f32 %v764, %v776
    %v778 = vpop.f32.mrf.mxu0
    %779 = vdwg.mxu0
    %780 = vmatpush.bf16.msra.mxu0 %v606
    %781 = vmatpush.bf16.msra.mxu0 %v604
    %782 = vmatpush.bf16.msra.mxu0 %v602
    %783 = vmatpush.bf16.msra.mxu0 %v600
    %784 = vmatpush.bf16.msra.mxu0 %v598
    %785 = vmatpush.bf16.msra.mxu0 %v596
    %786 = vmatpush.bf16.msra.mxu0 %v594
    %787 = vmatpush.bf16.msra.mxu0 %v592
    %788 = vmatmul.bf16.gmra.mxu0 %v225
    %v789 = vpop.f32.mrf.mxu0
    %v790 = vadd.f32 %v777, %v789
    %v791 = vpop.f32.mrf.mxu0
    %792 = vdwg.mxu0
    %793 = vmatpush.bf16.msra.mxu0 %v622
    %794 = vmatpush.bf16.msra.mxu0 %v620
    %795 = vmatpush.bf16.msra.mxu0 %v618
    %796 = vmatpush.bf16.msra.mxu0 %v616
    %797 = vmatpush.bf16.msra.mxu0 %v614
    %798 = vmatpush.bf16.msra.mxu0 %v612
    %799 = vmatpush.bf16.msra.mxu0 %v610
    %800 = vmatpush.bf16.msra.mxu0 %v608
    %801 = vmatmul.bf16.gmra.mxu0 %v226
    %v802 = vpop.f32.mrf.mxu0
    %v803 = vadd.f32 %v790, %v802
    %v804 = vpop.f32.mrf.mxu0
    %805 = vdwg.mxu0
    %806 = vmatpush.bf16.msra.mxu0 0
    %807 = vmatpush.bf16.msra.mxu0 0
    %808 = vmatpush.bf16.msra.mxu0 0
    %809 = vmatpush.bf16.msra.mxu0 0
    %810 = vmatpush.bf16.msra.mxu0 0
    %811 = vmatpush.bf16.msra.mxu0 0
    %812 = vmatpush.bf16.msra.mxu0 0
    %813 = vmatpush.bf16.msra.mxu0 %v624
    %814 = vmatmul.bf16.gmra.mxu0 %v726
    %v815 = vpop.f32.mrf.mxu0
    %v816 = vadd.f32 %v803, %v815
    %v817 = vpop.f32.mrf.mxu0
    %818 = vdwg.mxu0
    %819 = vmatpush.bf16.msra.mxu0 %v543
    %820 = vmatpush.bf16.msra.mxu0 %v541
    %821 = vmatpush.bf16.msra.mxu0 %v539
    %822 = vmatpush.bf16.msra.mxu0 %v537
    %823 = vmatpush.bf16.msra.mxu0 %v535
    %824 = vmatpush.bf16.msra.mxu0 %v533
    %825 = vmatpush.bf16.msra.mxu0 %v531
    %826 = vmatpush.bf16.msra.mxu0 %v529
    %827 = vmatmul.bf16.gmra.mxu0 %v221
    %v828 = vpop.f32.mrf.mxu0
    %v829 = vadd.f32 %v207, %v828
    %v830 = vpop.f32.mrf.mxu0
    %831 = vdwg.mxu0
    %832 = vmatpush.bf16.msra.mxu0 %v559
    %833 = vmatpush.bf16.msra.mxu0 %v557
    %834 = vmatpush.bf16.msra.mxu0 %v555
    %835 = vmatpush.bf16.msra.mxu0 %v553
    %836 = vmatpush.bf16.msra.mxu0 %v551
    %837 = vmatpush.bf16.msra.mxu0 %v549
    %838 = vmatpush.bf16.msra.mxu0 %v547
    %839 = vmatpush.bf16.msra.mxu0 %v545
    %840 = vmatmul.bf16.gmra.mxu0 %v222
    %v841 = vpop.f32.mrf.mxu0
    %v842 = vadd.f32 %v829, %v841
    %v843 = vpop.f32.mrf.mxu0
    %844 = vdwg.mxu0
    %845 = vmatpush.bf16.msra.mxu0 %v575
    %846 = vmatpush.bf16.msra.mxu0 %v573
    %847 = vmatpush.bf16.msra.mxu0 %v571
    %848 = vmatpush.bf16.msra.mxu0 %v569
    %849 = vmatpush.bf16.msra.mxu0 %v567
    %850 = vmatpush.bf16.msra.mxu0 %v565
    %851 = vmatpush.bf16.msra.mxu0 %v563
    %852 = vmatpush.bf16.msra.mxu0 %v561
    %853 = vmatmul.bf16.gmra.mxu0 %v223
    %v854 = vpop.f32.mrf.mxu0
    %v855 = vadd.f32 %v842, %v854
    %v856 = vpop.f32.mrf.mxu0
    %857 = vdwg.mxu0
    %858 = vmatpush.bf16.msra.mxu0 %v591
    %859 = vmatpush.bf16.msra.mxu0 %v589
    %860 = vmatpush.bf16.msra.mxu0 %v587
    %861 = vmatpush.bf16.msra.mxu0 %v585
    %862 = vmatpush.bf16.msra.mxu0 %v583
    %863 = vmatpush.bf16.msra.mxu0 %v581
    %864 = vmatpush.bf16.msra.mxu0 %v579
    %865 = vmatpush.bf16.msra.mxu0 %v577
    %866 = vmatmul.bf16.gmra.mxu0 %v224
    %v867 = vpop.f32.mrf.mxu0
    %v868 = vadd.f32 %v855, %v867
    %v869 = vpop.f32.mrf.mxu0
    %870 = vdwg.mxu0
    %871 = vmatpush.bf16.msra.mxu0 %v607
    %872 = vmatpush.bf16.msra.mxu0 %v605
    %873 = vmatpush.bf16.msra.mxu0 %v603
    %874 = vmatpush.bf16.msra.mxu0 %v601
    %875 = vmatpush.bf16.msra.mxu0 %v599
    %876 = vmatpush.bf16.msra.mxu0 %v597
    %877 = vmatpush.bf16.msra.mxu0 %v595
    %878 = vmatpush.bf16.msra.mxu0 %v593
    %879 = vmatmul.bf16.gmra.mxu0 %v225
    %v880 = vpop.f32.mrf.mxu0
    %v881 = vadd.f32 %v868, %v880
    %v882 = vpop.f32.mrf.mxu0
    %883 = vdwg.mxu0
    %884 = vmatpush.bf16.msra.mxu0 %v623
    %885 = vmatpush.bf16.msra.mxu0 %v621
    %886 = vmatpush.bf16.msra.mxu0 %v619
    %887 = vmatpush.bf16.msra.mxu0 %v617
    %888 = vmatpush.bf16.msra.mxu0 %v615
    %889 = vmatpush.bf16.msra.mxu0 %v613
    %890 = vmatpush.bf16.msra.mxu0 %v611
    %891 = vmatpush.bf16.msra.mxu0 %v609
    %892 = vmatmul.bf16.gmra.mxu0 %v226
    %v893 = vpop.f32.mrf.mxu0
    %v894 = vadd.f32 %v881, %v893
    %v895 = vpop.f32.mrf.mxu0
    %896 = vdwg.mxu0
    %897 = vmatpush.bf16.msra.mxu0 0
    %898 = vmatpush.bf16.msra.mxu0 0
    %899 = vmatpush.bf16.msra.mxu0 0
    %900 = vmatpush.bf16.msra.mxu0 0
    %901 = vmatpush.bf16.msra.mxu0 0
    %902 = vmatpush.bf16.msra.mxu0 0
    %903 = vmatpush.bf16.msra.mxu0 0
    %904 = vmatpush.bf16.msra.mxu0 %v625
    %905 = vmatmul.bf16.gmra.mxu0 %v726
    %v906 = vpop.f32.mrf.mxu0
    %v907 = vadd.f32 %v894, %v906
    %v908 = vpop.f32.mrf.mxu0
    %909 = vdwg.mxu0
    %v910 = vmax.f32 %v816, 0.0
    %v911 = vmax.f32 %v907, 0.0
    %v912 = vpack.c.bf16 %v910, %v910
    %v913 = vpack.c.bf16 %v911, %v911
    %v914 = vld [vmem:[#allocation8] sm:$0xff]
    %v915 = vld [vmem:[#allocation8 + $0x8] sm:$0xff]
    %v916 = vld [vmem:[#allocation8 + $0x10] sm:$0xff]
    %v917 = vld [vmem:[#allocation8 + $0x18] sm:$0xff]
    %v918 = vld [vmem:[#allocation8 + $0x20] sm:$0xff]
    %v919 = vld [vmem:[#allocation8 + $0x28] sm:$0xff]
    %v920 = vld [vmem:[#allocation8 + $0x30] sm:$0xff]
    %v921 = vld [vmem:[#allocation8 + $0x38] sm:$0xff]
    %v922 = vld [vmem:[#allocation8 + $0x40] sm:$0xff]
    %v923 = vld [vmem:[#allocation8 + $0x48] sm:$0xff]
    %v924 = vld [vmem:[#allocation8 + $0x50] sm:$0xff]
    %v925 = vld [vmem:[#allocation8 + $0x58] sm:$0xff]
    %v926 = vld [vmem:[#allocation8 + $0x60] sm:$0xff]
    %v927 = vld [vmem:[#allocation8 + $0x68] sm:$0xff]
    %v928 = vld [vmem:[#allocation8 + $0x70] sm:$0xff]
    %v929 = vld [vmem:[#allocation8 + $0x78] sm:$0xff]
    %v930 = vld [vmem:[#allocation8 + $0x80] sm:$0xff]
    %v931 = vld [vmem:[#allocation8 + $0x88] sm:$0xff]
    %v932 = vld [vmem:[#allocation8 + $0x90] sm:$0xff]
    %v933 = vld [vmem:[#allocation8 + $0x98] sm:$0xff]
    %v934 = vld [vmem:[#allocation8 + $0xa0] sm:$0xff]
    %v935 = vld [vmem:[#allocation8 + $0xa8] sm:$0xff]
    %v936 = vld [vmem:[#allocation8 + $0xb0] sm:$0xff]
    %v937 = vld [vmem:[#allocation8 + $0xb8] sm:$0xff]
    %v938 = vld [vmem:[#allocation8 + $0xc0] sm:$0xff]
    %v939 = vld [vmem:[#allocation8 + $0xc8] sm:$0xff]
    %v940 = vld [vmem:[#allocation8 + $0xd0] sm:$0xff]
    %v941 = vld [vmem:[#allocation8 + $0xd8] sm:$0xff]
    %v942 = vld [vmem:[#allocation8 + $0xe0] sm:$0xff]
    %v943 = vld [vmem:[#allocation8 + $0xe8] sm:$0xff]
    %v944 = vld [vmem:[#allocation8 + $0xf0] sm:$0xff]
    %v945 = vld [vmem:[#allocation8 + $0xf8] sm:$0xff]
    %v946 = vld [vmem:[%s4] sm:$0x3]
    %v948 = vperm.slane %v946, 0
    %v949 = vperm.slane %v946, 1
    %v984 = vunpack.c.l.b16 %v914
    %v985 = vunpack.c.h.b16 %v914
    %v986 = vunpack.c.l.b16 %v915
    %v987 = vunpack.c.h.b16 %v915
    %v988 = vunpack.c.l.b16 %v916
    %v989 = vunpack.c.h.b16 %v916
    %v990 = vunpack.c.l.b16 %v917
    %v991 = vunpack.c.h.b16 %v917
    %v992 = vunpack.c.l.b16 %v918
    %v993 = vunpack.c.h.b16 %v918
    %v994 = vunpack.c.l.b16 %v919
    %v995 = vunpack.c.h.b16 %v919
    %v996 = vunpack.c.l.b16 %v920
    %v997 = vunpack.c.h.b16 %v920
    %v998 = vunpack.c.l.b16 %v921
    %v999 = vunpack.c.h.b16 %v921
    %v1000 = vunpack.c.l.b16 %v922
    %v1001 = vunpack.c.h.b16 %v922
    %v1002 = vunpack.c.l.b16 %v923
    %v1003 = vunpack.c.h.b16 %v923
    %v1004 = vunpack.c.l.b16 %v924
    %v1005 = vunpack.c.h.b16 %v924
    %v1006 = vunpack.c.l.b16 %v925
    %v1007 = vunpack.c.h.b16 %v925
    %v1008 = vunpack.c.l.b16 %v926
    %v1009 = vunpack.c.h.b16 %v926
    %v1010 = vunpack.c.l.b16 %v927
    %v1011 = vunpack.c.h.b16 %v927
    %v1012 = vunpack.c.l.b16 %v928
    %v1013 = vunpack.c.h.b16 %v928
    %v1014 = vunpack.c.l.b16 %v929
    %v1015 = vunpack.c.h.b16 %v929
    %v1016 = vunpack.c.l.b16 %v930
    %v1017 = vunpack.c.h.b16 %v930
    %v1018 = vunpack.c.l.b16 %v931
    %v1019 = vunpack.c.h.b16 %v931
    %v1020 = vunpack.c.l.b16 %v932
    %v1021 = vunpack.c.h.b16 %v932
    %v1022 = vunpack.c.l.b16 %v933
    %v1023 = vunpack.c.h.b16 %v933
    %v1024 = vunpack.c.l.b16 %v934
    %v1025 = vunpack.c.h.b16 %v934
    %v1026 = vunpack.c.l.b16 %v935
    %v1027 = vunpack.c.h.b16 %v935
    %v1028 = vunpack.c.l.b16 %v936
    %v1029 = vunpack.c.h.b16 %v936
    %v1030 = vunpack.c.l.b16 %v937
    %v1031 = vunpack.c.h.b16 %v937
    %v1032 = vunpack.c.l.b16 %v938
    %v1033 = vunpack.c.h.b16 %v938
    %v1034 = vunpack.c.l.b16 %v939
    %v1035 = vunpack.c.h.b16 %v939
    %v1036 = vunpack.c.l.b16 %v940
    %v1037 = vunpack.c.h.b16 %v940
    %v1038 = vunpack.c.l.b16 %v941
    %v1039 = vunpack.c.h.b16 %v941
    %v1040 = vunpack.c.l.b16 %v942
    %v1041 = vunpack.c.h.b16 %v942
    %v1042 = vunpack.c.l.b16 %v943
    %v1043 = vunpack.c.h.b16 %v943
    %v1044 = vunpack.c.l.b16 %v944
    %v1045 = vunpack.c.h.b16 %v944
    %v1046 = vunpack.c.l.b16 %v945
    %v1047 = vunpack.c.h.b16 %v945
    %v1048 = vpack.c.b16 %v986, %v984
    %v1049 = vpack.c.b16 %v987, %v985
    %v1050 = vpack.c.b16 %v990, %v988
    %v1051 = vpack.c.b16 %v991, %v989
    %v1052 = vpack.c.b16 %v994, %v992
    %v1053 = vpack.c.b16 %v995, %v993
    %v1054 = vpack.c.b16 %v998, %v996
    %v1055 = vpack.c.b16 %v999, %v997
    %v1056 = vpack.c.b16 %v1002, %v1000
    %v1057 = vpack.c.b16 %v1003, %v1001
    %v1058 = vpack.c.b16 %v1006, %v1004
    %v1059 = vpack.c.b16 %v1007, %v1005
    %v1060 = vpack.c.b16 %v1010, %v1008
    %v1061 = vpack.c.b16 %v1011, %v1009
    %v1062 = vpack.c.b16 %v1014, %v1012
    %v1063 = vpack.c.b16 %v1015, %v1013
    %v1064 = vpack.c.b16 %v1018, %v1016
    %v1065 = vpack.c.b16 %v1019, %v1017
    %v1066 = vpack.c.b16 %v1022, %v1020
    %v1067 = vpack.c.b16 %v1023, %v1021
    %v1068 = vpack.c.b16 %v1026, %v1024
    %v1069 = vpack.c.b16 %v1027, %v1025
    %v1070 = vpack.c.b16 %v1030, %v1028
    %v1071 = vpack.c.b16 %v1031, %v1029
    %v1072 = vpack.c.b16 %v1034, %v1032
    %v1073 = vpack.c.b16 %v1035, %v1033
    %v1074 = vpack.c.b16 %v1038, %v1036
    %v1075 = vpack.c.b16 %v1039, %v1037
    %v1076 = vpack.c.b16 %v1042, %v1040
    %v1077 = vpack.c.b16 %v1043, %v1041
    %v1078 = vpack.c.b16 %v1046, %v1044
    %v1079 = vpack.c.b16 %v1047, %v1045
    %1112 = vmatpush.bf16.msra.mxu0 %v1062
    %1113 = vmatpush.bf16.msra.mxu0 %v1060
    %1114 = vmatpush.bf16.msra.mxu0 %v1058
    %1115 = vmatpush.bf16.msra.mxu0 %v1056
    %1116 = vmatpush.bf16.msra.mxu0 %v1054
    %1117 = vmatpush.bf16.msra.mxu0 %v1052
    %1118 = vmatpush.bf16.msra.mxu0 %v1050
    %1119 = vmatpush.bf16.msra.mxu0 %v1048
    %1120 = vmatmul.bf16.gmra.mxu0 %v912
    %v1121 = vpop.f32.mrf.mxu0
    %v1122 = vadd.f32 %v948, %v1121
    %v1123 = vpop.f32.mrf.mxu0
    %1124 = vdwg.mxu0
    %1125 = vmatpush.bf16.msra.mxu0 %v1078
    %1126 = vmatpush.bf16.msra.mxu0 %v1076
    %1127 = vmatpush.bf16.msra.mxu0 %v1074
    %1128 = vmatpush.bf16.msra.mxu0 %v1072
    %1129 = vmatpush.bf16.msra.mxu0 %v1070
    %1130 = vmatpush.bf16.msra.mxu0 %v1068
    %1131 = vmatpush.bf16.msra.mxu0 %v1066
    %1132 = vmatpush.bf16.msra.mxu0 %v1064
    %1133 = vmatmul.bf16.gmra.mxu0 %v913
    %v1134 = vpop.f32.mrf.mxu0
    %v1135 = vadd.f32 %v1122, %v1134
    %v1136 = vpop.f32.mrf.mxu0
    %1137 = vdwg.mxu0
    %1138 = vmatpush.bf16.msra.mxu0 %v1063
    %1139 = vmatpush.bf16.msra.mxu0 %v1061
    %1140 = vmatpush.bf16.msra.mxu0 %v1059
    %1141 = vmatpush.bf16.msra.mxu0 %v1057
    %1142 = vmatpush.bf16.msra.mxu0 %v1055
    %1143 = vmatpush.bf16.msra.mxu0 %v1053
    %1144 = vmatpush.bf16.msra.mxu0 %v1051
    %1145 = vmatpush.bf16.msra.mxu0 %v1049
    %1146 = vmatmul.bf16.gmra.mxu0 %v912
    %v1147 = vpop.f32.mrf.mxu0
    %v1148 = vadd.f32 %v949, %v1147
    %v1149 = vpop.f32.mrf.mxu0
    %1150 = vdwg.mxu0
    %1151 = vmatpush.bf16.msra.mxu0 %v1079
    %1152 = vmatpush.bf16.msra.mxu0 %v1077
    %1153 = vmatpush.bf16.msra.mxu0 %v1075
    %1154 = vmatpush.bf16.msra.mxu0 %v1073
    %1155 = vmatpush.bf16.msra.mxu0 %v1071
    %1156 = vmatpush.bf16.msra.mxu0 %v1069
    %1157 = vmatpush.bf16.msra.mxu0 %v1067
    %1158 = vmatpush.bf16.msra.mxu0 %v1065
    %1159 = vmatmul.bf16.gmra.mxu0 %v913
    %v1160 = vpop.f32.mrf.mxu0
    %v1161 = vadd.f32 %v1148, %v1160
    %v1162 = vpop.f32.mrf.mxu0
    %1163 = vdwg.mxu0
    %v1164 = vmax.f32 %v1135, 0.0
    %v1165 = vmax.f32 %v1161, 0.0
    %v1166 = vpack.c.bf16 %v1164, %v1164
    %v1167 = vpack.c.bf16 %v1165, %v1165
    %v1168 = vld [vmem:[#allocation10] sm:$0xf]
    %v1169 = vld [vmem:[#allocation10 + $0x4] sm:$0xf]
    %v1170 = vld [vmem:[#allocation10 + $0x8] sm:$0xf]
    %v1171 = vld [vmem:[#allocation10 + $0xc] sm:$0xf]
    %v1172 = vld [vmem:[#allocation10 + $0x10] sm:$0xf]
    %v1173 = vld [vmem:[#allocation10 + $0x14] sm:$0xf]
    %v1174 = vld [vmem:[#allocation10 + $0x18] sm:$0xf]
    %v1175 = vld [vmem:[#allocation10 + $0x1c] sm:$0xf]
    %v1176 = vld [vmem:[#allocation10 + $0x20] sm:$0xf]
    %v1177 = vld [vmem:[#allocation10 + $0x24] sm:$0xf]
    %v1178 = vld [vmem:[#allocation10 + $0x28] sm:$0xf]
    %v1179 = vld [vmem:[#allocation10 + $0x2c] sm:$0xf]
    %v1180 = vld [vmem:[#allocation10 + $0x30] sm:$0xf]
    %v1181 = vld [vmem:[#allocation10 + $0x34] sm:$0xf]
    %v1182 = vld [vmem:[#allocation10 + $0x38] sm:$0xf]
    %v1183 = vld [vmem:[#allocation10 + $0x3c] sm:$0xf]
    %v1184 = vld [vmem:[#allocation10 + $0x40] sm:$0xf]
    %v1185 = vld [vmem:[#allocation10 + $0x44] sm:$0xf]
    %v1186 = vld [vmem:[#allocation10 + $0x48] sm:$0xf]
    %v1187 = vld [vmem:[#allocation10 + $0x4c] sm:$0xf]
    %v1188 = vld [vmem:[#allocation10 + $0x50] sm:$0xf]
    %v1189 = vld [vmem:[#allocation10 + $0x54] sm:$0xf]
    %v1190 = vld [vmem:[#allocation10 + $0x58] sm:$0xf]
    %v1191 = vld [vmem:[#allocation10 + $0x5c] sm:$0xf]
    %v1192 = vld [vmem:[#allocation10 + $0x60] sm:$0xf]
    %v1193 = vld [vmem:[#allocation10 + $0x64] sm:$0xf]
    %v1194 = vld [vmem:[#allocation10 + $0x68] sm:$0xf]
    %v1195 = vld [vmem:[#allocation10 + $0x6c] sm:$0xf]
    %v1196 = vld [vmem:[#allocation10 + $0x70] sm:$0xf]
    %v1197 = vld [vmem:[#allocation10 + $0x74] sm:$0xf]
    %v1198 = vld [vmem:[#allocation10 + $0x78] sm:$0xf]
    %v1199 = vld [vmem:[#allocation10 + $0x7c] sm:$0xf]
    %v1200 = vld [vmem:[%s6] sm:$0x1]
    %v1202 = vperm.slane %v1200, 0
    %v1236 = vunpack.c.l.b16 %v1168
    %v1237 = vunpack.c.l.b16 %v1169
    %v1238 = vunpack.c.l.b16 %v1170
    %v1239 = vunpack.c.l.b16 %v1171
    %v1240 = vunpack.c.l.b16 %v1172
    %v1241 = vunpack.c.l.b16 %v1173
    %v1242 = vunpack.c.l.b16 %v1174
    %v1243 = vunpack.c.l.b16 %v1175
    %v1244 = vunpack.c.l.b16 %v1176
    %v1245 = vunpack.c.l.b16 %v1177
    %v1246 = vunpack.c.l.b16 %v1178
    %v1247 = vunpack.c.l.b16 %v1179
    %v1248 = vunpack.c.l.b16 %v1180
    %v1249 = vunpack.c.l.b16 %v1181
    %v1250 = vunpack.c.l.b16 %v1182
    %v1251 = vunpack.c.l.b16 %v1183
    %v1252 = vunpack.c.l.b16 %v1184
    %v1253 = vunpack.c.l.b16 %v1185
    %v1254 = vunpack.c.l.b16 %v1186
    %v1255 = vunpack.c.l.b16 %v1187
    %v1256 = vunpack.c.l.b16 %v1188
    %v1257 = vunpack.c.l.b16 %v1189
    %v1258 = vunpack.c.l.b16 %v1190
    %v1259 = vunpack.c.l.b16 %v1191
    %v1260 = vunpack.c.l.b16 %v1192
    %v1261 = vunpack.c.l.b16 %v1193
    %v1262 = vunpack.c.l.b16 %v1194
    %v1263 = vunpack.c.l.b16 %v1195
    %v1264 = vunpack.c.l.b16 %v1196
    %v1265 = vunpack.c.l.b16 %v1197
    %v1266 = vunpack.c.l.b16 %v1198
    %v1267 = vunpack.c.l.b16 %v1199
    %v1268 = vpack.c.b16 %v1237, %v1236
    %v1269 = vpack.c.b16 %v1239, %v1238
    %v1270 = vpack.c.b16 %v1241, %v1240
    %v1271 = vpack.c.b16 %v1243, %v1242
    %v1272 = vpack.c.b16 %v1245, %v1244
    %v1273 = vpack.c.b16 %v1247, %v1246
    %v1274 = vpack.c.b16 %v1249, %v1248
    %v1275 = vpack.c.b16 %v1251, %v1250
    %v1276 = vpack.c.b16 %v1253, %v1252
    %v1277 = vpack.c.b16 %v1255, %v1254
    %v1278 = vpack.c.b16 %v1257, %v1256
    %v1279 = vpack.c.b16 %v1259, %v1258
    %v1280 = vpack.c.b16 %v1261, %v1260
    %v1281 = vpack.c.b16 %v1263, %v1262
    %v1282 = vpack.c.b16 %v1265, %v1264
    %v1283 = vpack.c.b16 %v1267, %v1266
    %1300 = vmatpush.bf16.msra.mxu0 %v1275
    %1301 = vmatpush.bf16.msra.mxu0 %v1274
    %1302 = vmatpush.bf16.msra.mxu0 %v1273
    %1303 = vmatpush.bf16.msra.mxu0 %v1272
    %1304 = vmatpush.bf16.msra.mxu0 %v1271
    %1305 = vmatpush.bf16.msra.mxu0 %v1270
    %1306 = vmatpush.bf16.msra.mxu0 %v1269
    %1307 = vmatpush.bf16.msra.mxu0 %v1268
    %1308 = vmatmul.bf16.gmra.mxu0 %v1166
    %v1309 = vpop.f32.mrf.mxu0
    %v1310 = vadd.f32 %v1202, %v1309
    %v1311 = vpop.f32.mrf.mxu0
    %1312 = vdwg.mxu0
    %1313 = vmatpush.bf16.msra.mxu0 %v1283
    %1314 = vmatpush.bf16.msra.mxu0 %v1282
    %1315 = vmatpush.bf16.msra.mxu0 %v1281
    %1316 = vmatpush.bf16.msra.mxu0 %v1280
    %1317 = vmatpush.bf16.msra.mxu0 %v1279
    %1318 = vmatpush.bf16.msra.mxu0 %v1278
    %1319 = vmatpush.bf16.msra.mxu0 %v1277
    %1320 = vmatpush.bf16.msra.mxu0 %v1276
    %1321 = vmatmul.bf16.gmra.mxu0 %v1167
    %v1322 = vpop.f32.mrf.mxu0
    %v1323 = vadd.f32 %v1310, %v1322
    %v1324 = vpop.f32.mrf.mxu0
    %1325 = vdwg.mxu0
    %v1326 = vmax.f32 %v1323, 0.0
    %v1327 = vpack.c.bf16 %v1326, %v1326
    %1328 = vst [vmem:[#allocation11] sm:$0xf] %v1327
    // Predicated region
    $region50: #{tpu_custom_call.1} parent=1 // pred_check
      _
    $region51: #{tpu_custom_call.1} parent=1 // pred_check_branch
      %1330 = sbr.rel (0) target = $region53
    $region52: #{tpu_custom_call.1} parent=1 // pred_region
      %1332 = vsyncadd [#allocation4], 0
      %s1334 = sshll.u32 [#allocation11], 4
      %s1335 = int_to_ptr.vmem [resolvable:$true] %s1334
      %s1336 = sshll.u32 %s7, 4
      %s1337 = int_to_ptr.hbm [resolvable:$true] %s1336
      %1339 = dma.vmem_to_hbm [thread:$0]  %s1335, 64, %s1337, [#allocation4]
    $region53: #{tpu_custom_call.1} parent=1 // pred_fallthru
      _
    // Predicated region
    $region54: #{tpu_custom_call.1} parent=1 // pred_check
      _
    $region55: #{tpu_custom_call.1} parent=1 // pred_check_branch
      %1341 = sbr.rel (0) target = $region57
    $region56: #{tpu_custom_call.1} parent=1 // pred_region
      %1343 = dma.done [#allocation4], 64
    $region57: #{tpu_custom_call.1} parent=1 // pred_fallthru
      _
    %1344 = vsyncpa [#allocation3], 1
    %1345 = vsyncpa [#allocation6], 1
    %1346 = vsyncpa [#allocation9], 1
    %1347 = vsyncpa [#allocation4], 1

</llo_original>
